<compile_context>
chip_gen: v7x
topology: tpu7x:2x2x1
jax: 0.10.0
libtpu: 0.0.40
codegen_flags: <defaults>
</compile_context>

<pallas_src>
import functools
import numpy as np

import jax
import jax.numpy as jnp
from jax.experimental import pallas as pl
from jax.experimental.pallas import tpu as pltpu


# ----------------------------------------------------------------------------
# Kernel: out = x @ Wn + b, Wn = (optionally) l2-normalized weight.
# w_ref holds weight.T zero-padded to 128 output lanes.
# ----------------------------------------------------------------------------
def _linear_kernel(x_ref, w_ref, b_ref, o_ref, *, normalize_weight):
    w = w_ref[...]                                    # (K, N_pad) f32, resident
    if normalize_weight:
        # PyTorch: l2_norm(weight, axis=0) normalizes each length-2 column of
        # weight (out, in); in the transposed (K, N_pad) layout that is a
        # per-row normalization.  Zero-padded lanes do not affect the sum.
        inv = jax.lax.rsqrt(jnp.sum(w * w, axis=1, keepdims=True))
        w = w * inv
    # bf16 feeds the MXU at native rate; accumulate in f32.
    acc = jnp.dot(x_ref[...].astype(jnp.bfloat16),
                  w.astype(jnp.bfloat16),
                  preferred_element_type=jnp.float32)
    o_ref[...] = (acc + b_ref[...]).astype(o_ref.dtype)


def _round_up(x, m):
    return ((x + m - 1) // m) * m


# ----------------------------------------------------------------------------
# Wrapper
# ----------------------------------------------------------------------------
@functools.partial(jax.jit, static_argnums=(3,), static_argnames=("tile_m",))
def classifier_forward(x, weight, bias, norm_flag, *, tile_m=512):
    """x: (M, 512) f32, weight: (2, 512) (PyTorch layout), bias: (2,)."""
    M, K = x.shape
    n_out, K2 = weight.shape
    assert K == K2, (K, K2)

    # Lane-dense output: pad the 2 output features to 128 lanes with zeros.
    N_pad = _round_up(max(n_out, 128), 128)
    wt = jnp.zeros((K, N_pad), jnp.float32).at[:, :n_out].set(
        weight.T.astype(jnp.float32))
    b = jnp.zeros((1, N_pad), jnp.float32).at[:, :n_out].set(
        bias.astype(jnp.float32)[None, :])

    # Big M tiles amortize per-step overhead; ragged last tile handled by Pallas
    # (no jnp.pad of x -> no extra HBM round-trip on the activations).
    TM = min(tile_m, _round_up(M, 8))
    grid_m = pl.cdiv(M, TM)

    flops = 2 * M * K * N_pad
    bytes_accessed = 4 * (M * K + K * N_pad + N_pad + M * N_pad)

    out = pl.pallas_call(
        functools.partial(_linear_kernel, normalize_weight=bool(norm_flag)),
        out_shape=jax.ShapeDtypeStruct((M, N_pad), jnp.float32),
        grid_spec=pltpu.PrefetchScalarGridSpec(
            num_scalar_prefetch=0,
            grid=(grid_m,),
            in_specs=[
                pl.BlockSpec((TM, K), lambda i: (i, 0)),     # activation tile
                pl.BlockSpec((K, N_pad), lambda i: (0, 0)),  # weight (resident)
                pl.BlockSpec((1, N_pad), lambda i: (0, 0)),  # bias (resident)
            ],
            out_specs=pl.BlockSpec((TM, N_pad), lambda i: (i, 0)),
        ),
        compiler_params=pltpu.CompilerParams(
            dimension_semantics=("parallel",)),
        cost_estimate=pl.CostEstimate(flops=flops, transcendentals=0,
                                      bytes_accessed=bytes_accessed),
    )(x.astype(jnp.float32), wt, b)
    return out[:, :n_out]


# ----------------------------------------------------------------------------
# Pure-JAX reference (mirrors the PyTorch forward)
# ----------------------------------------------------------------------------
def _reference(x, weight, bias, norm_flag):
    w = weight
    if norm_flag:
        w = w / jnp.linalg.norm(w, ord=2, axis=0, keepdims=True)
    return x @ w.T + bias
# TODO(synk): the PyTorch module mutates classifier_layer.weight.data in place
# when norm_flag=True; here the normalization is functional (same output).


# ----------------------------------------------------------------------------
if __name__ == "__main__":
    key = jax.random.PRNGKey(0)
    kx, kw = jax.random.split(key)

    # Small shapes consistent with the module: Linear(512, 2), batch = 8.
    x = jax.random.normal(kx, (8, 512), jnp.float32)
    weight = 0.01 * jax.random.normal(kw, (2, 512), jnp.float32)  # normal_(0, 0.01)
    bias = jnp.zeros((2,), jnp.float32)                            # fill_(0.0)

    for norm_flag in (True, False):
        out = classifier_forward(x, weight, bias, norm_flag)
        out = jax.block_until_ready(out)
        assert out.shape == (8, 2), out.shape
        assert bool(jnp.all(jnp.isfinite(out)))

        ref = np.asarray(_reference(x, weight, bias, norm_flag))
        tol = 3e-2 * float(np.max(np.abs(ref))) + 1e-5   # bf16-MXU tolerance
        np.testing.assert_allclose(np.asarray(out), ref, rtol=3e-2, atol=tol)

    print("KERNEL_OK")
</pallas_src>

<mosaic_0001>
module attributes {stable_mosaic.version = 11 : i64} {
  func.func @_linear_kernel(%arg0: i32, %arg1: memref<8x512xf32, #tpu.memory_space<vmem>>, %arg2: memref<512x128xf32, #tpu.memory_space<vmem>>, %arg3: memref<1x128xf32, #tpu.memory_space<vmem>>, %arg4: memref<8x128xf32, #tpu.memory_space<vmem>>) attributes {dimension_semantics = [#tpu.dimension_semantics<parallel>], iteration_bounds = array<i64: 1>, scalar_prefetch = 0 : i64, scratch_operands = 0 : i64, tpu.core_type = #tpu.core_type<tc>, window_params = [{transform_indices = @transform_0, window_bounds = array<i64: 8, 512>}, {pipeline_mode = #tpu.pipeline_mode<synchronous>, transform_indices = @transform_1, window_bounds = array<i64: 512, 128>}, {pipeline_mode = #tpu.pipeline_mode<synchronous>, transform_indices = @transform_2, window_bounds = array<i64: 1, 128>}, {transform_indices = @transform_3, window_bounds = array<i64: 8, 128>}]} {
    %c0 = arith.constant 0 : index
    %c0_0 = arith.constant 0 : index
    %0 = vector.load %arg2[%c0, %c0_0] : memref<512x128xf32, #tpu.memory_space<vmem>>, vector<512x128xf32>
    %1 = arith.mulf %0, %0 : vector<512x128xf32>
    %cst = arith.constant dense<0.000000e+00> : vector<512xf32>
    %2 = vector.multi_reduction <add>, %1, %cst [1] : vector<512x128xf32> to vector<512xf32>
    %3 = vector.shape_cast %2 : vector<512xf32> to vector<512x1xf32>
    %4 = math.rsqrt %3 : vector<512x1xf32>
    %5 = vector.broadcast %4 : vector<512x1xf32> to vector<512x128xf32>
    %6 = arith.mulf %0, %5 : vector<512x128xf32>
    %c0_1 = arith.constant 0 : index
    %c0_2 = arith.constant 0 : index
    %7 = vector.load %arg1[%c0_1, %c0_2] : memref<8x512xf32, #tpu.memory_space<vmem>>, vector<8x512xf32>
    %8 = arith.truncf %7 : vector<8x512xf32> to vector<8x512xbf16>
    %9 = arith.truncf %6 : vector<512x128xf32> to vector<512x128xbf16>
    %cst_3 = arith.constant dense<0.000000e+00> : vector<8x128xf32>
    %10 = tpu.matmul %8, %9, %cst_3 {dimension_numbers = #tpu.dot_dimension_numbers<[1], [0], [0], [1], [0, 0, 1, 1], [], []>} : vector<8x512xbf16>, vector<512x128xbf16>, vector<8x128xf32> -> vector<8x128xf32>
    %c0_4 = arith.constant 0 : index
    %c0_5 = arith.constant 0 : index
    %11 = vector.load %arg3[%c0_4, %c0_5] : memref<1x128xf32, #tpu.memory_space<vmem>>, vector<1x128xf32>
    %12 = vector.broadcast %11 : vector<1x128xf32> to vector<8x128xf32>
    %13 = arith.addf %10, %12 : vector<8x128xf32>
    %c0_6 = arith.constant 0 : index
    %c0_7 = arith.constant 0 : index
    %14 = vector.load %arg4[%c0_6, %c0_7] : memref<8x128xf32, #tpu.memory_space<vmem>>, vector<8x128xf32>
    tpu.vector_store %arg4[%c0_6, %c0_7], %13 {strides = array<i32>} : memref<8x128xf32, #tpu.memory_space<vmem>>, vector<8x128xf32>,
    return
  }
  func.func @transform_0(%arg0: i32) -> (i32, i32) {
    %c0_i32 = arith.constant 0 : i32
    %c0_i32_0 = arith.constant 0 : i32
    return %arg0, %c0_i32 : i32, i32
  }
  func.func @transform_1(%arg0: i32) -> (i32, i32) {
    %c0_i32 = arith.constant 0 : i32
    %c0_i32_0 = arith.constant 0 : i32
    %c0_i32_1 = arith.constant 0 : i32
    return %c0_i32, %c0_i32_0 : i32, i32
  }
  func.func @transform_2(%arg0: i32) -> (i32, i32) {
    %c0_i32 = arith.constant 0 : i32
    %c0_i32_0 = arith.constant 0 : i32
    %c0_i32_1 = arith.constant 0 : i32
    return %c0_i32, %c0_i32_0 : i32, i32
  }
  func.func @transform_3(%arg0: i32) -> (i32, i32) {
    %c0_i32 = arith.constant 0 : i32
    %c0_i32_0 = arith.constant 0 : i32
    return %arg0, %c0_i32 : i32, i32
  }
}

</mosaic_0001>

<llo_original>
// kernel: classifier_forward.1
$region0: #{classifier_forward.1}
  #allocation0 [shape = 'u32[]', space=smem, size = 0x4, offset = 0x4, fixed_abs, tag = 'smem constant byte address 0x4 - core index']
  #allocation1 [shape = 'u32[144,128]{1,0:T(1,128)}', space=vmem, size = 0x12000, scoped, tag = 'internal scratch']
  %s0 = inlined_call_operand.vmem [shape: f32[8,512], index: 0, kind: input, shape index: {}]
  %s1 = inlined_call_operand.vmem [shape: f32[512,128], index: 1, kind: input, shape index: {}]
  %s2 = inlined_call_operand.vmem [shape: f32[1,128], index: 2, kind: input, shape index: {}]
  %s3 = inlined_call_operand.vmem [shape: f32[8,128], index: 3, kind: output, shape index: {}]
  %s4 = sld [smem:[#allocation0]]
  $region22: #{classifier_forward.1} parent=0
    _
  %s6 = ssub.s32 1, %s4
  %s7 = scalar_select 0, %s6, %s4
  // Predicated region
  $region2: #{classifier_forward.1} parent=0 // pred_check
    _
  $region3: #{classifier_forward.1} parent=0 // pred_check_branch
    %9 = sbr.rel (0) target = $region5
  $region4: #{classifier_forward.1} parent=0 // pred_region
    _
  $region5: #{classifier_forward.1} parent=0 // pred_fallthru
    _
  // Predicated region
  $region6: #{classifier_forward.1} parent=0 // pred_check
    _
  $region7: #{classifier_forward.1} parent=0 // pred_check_branch
    %11 = sbr.rel (0) target = $region9
  $region8: #{classifier_forward.1} parent=0 // pred_region
    _
  $region9: #{classifier_forward.1} parent=0 // pred_fallthru
    _
  // Predicated region
  $region10: #{classifier_forward.1} parent=0 // pred_check
    _
  $region11: #{classifier_forward.1} parent=0 // pred_check_branch
    %13 = sbr.rel (0) target = $region13
  $region12: #{classifier_forward.1} parent=0 // pred_region
    _
  $region13: #{classifier_forward.1} parent=0 // pred_fallthru
    _
  %v15 = vld [vmem:[%s1] sm:$0xff]
  %v16 = vld [vmem:[%s1 + $0x8] sm:$0xff]
  %v17 = vld [vmem:[%s1 + $0x10] sm:$0xff]
  %v18 = vld [vmem:[%s1 + $0x18] sm:$0xff]
  %v19 = vld [vmem:[%s1 + $0x20] sm:$0xff]
  %v20 = vld [vmem:[%s1 + $0x28] sm:$0xff]
  %v21 = vld [vmem:[%s1 + $0x30] sm:$0xff]
  %v22 = vld [vmem:[%s1 + $0x38] sm:$0xff]
  %v23 = vld [vmem:[%s1 + $0x40] sm:$0xff]
  %v24 = vld [vmem:[%s1 + $0x48] sm:$0xff]
  %v25 = vld [vmem:[%s1 + $0x50] sm:$0xff]
  %v26 = vld [vmem:[%s1 + $0x58] sm:$0xff]
  %v27 = vld [vmem:[%s1 + $0x60] sm:$0xff]
  %v28 = vld [vmem:[%s1 + $0x68] sm:$0xff]
  %v29 = vld [vmem:[%s1 + $0x70] sm:$0xff]
  %v30 = vld [vmem:[%s1 + $0x78] sm:$0xff]
  %v31 = vld [vmem:[%s1 + $0x80] sm:$0xff]
  %v32 = vld [vmem:[%s1 + $0x88] sm:$0xff]
  %v33 = vld [vmem:[%s1 + $0x90] sm:$0xff]
  %v34 = vld [vmem:[%s1 + $0x98] sm:$0xff]
  %v35 = vld [vmem:[%s1 + $0xa0] sm:$0xff]
  %v36 = vld [vmem:[%s1 + $0xa8] sm:$0xff]
  %v37 = vld [vmem:[%s1 + $0xb0] sm:$0xff]
  %v38 = vld [vmem:[%s1 + $0xb8] sm:$0xff]
  %v39 = vld [vmem:[%s1 + $0xc0] sm:$0xff]
  %v40 = vld [vmem:[%s1 + $0xc8] sm:$0xff]
  %v41 = vld [vmem:[%s1 + $0xd0] sm:$0xff]
  %v42 = vld [vmem:[%s1 + $0xd8] sm:$0xff]
  %v43 = vld [vmem:[%s1 + $0xe0] sm:$0xff]
  %v44 = vld [vmem:[%s1 + $0xe8] sm:$0xff]
  %v45 = vld [vmem:[%s1 + $0xf0] sm:$0xff]
  %v46 = vld [vmem:[%s1 + $0xf8] sm:$0xff]
  %v47 = vld [vmem:[%s1 + $0x100] sm:$0xff]
  %v48 = vld [vmem:[%s1 + $0x108] sm:$0xff]
  %v49 = vld [vmem:[%s1 + $0x110] sm:$0xff]
  %v50 = vld [vmem:[%s1 + $0x118] sm:$0xff]
  %v51 = vld [vmem:[%s1 + $0x120] sm:$0xff]
  %v52 = vld [vmem:[%s1 + $0x128] sm:$0xff]
  %v53 = vld [vmem:[%s1 + $0x130] sm:$0xff]
  %v54 = vld [vmem:[%s1 + $0x138] sm:$0xff]
  %v55 = vld [vmem:[%s1 + $0x140] sm:$0xff]
  %v56 = vld [vmem:[%s1 + $0x148] sm:$0xff]
  %v57 = vld [vmem:[%s1 + $0x150] sm:$0xff]
  %v58 = vld [vmem:[%s1 + $0x158] sm:$0xff]
  %v59 = vld [vmem:[%s1 + $0x160] sm:$0xff]
  %v60 = vld [vmem:[%s1 + $0x168] sm:$0xff]
  %v61 = vld [vmem:[%s1 + $0x170] sm:$0xff]
  %v62 = vld [vmem:[%s1 + $0x178] sm:$0xff]
  %v63 = vld [vmem:[%s1 + $0x180] sm:$0xff]
  %v64 = vld [vmem:[%s1 + $0x188] sm:$0xff]
  %v65 = vld [vmem:[%s1 + $0x190] sm:$0xff]
  %v66 = vld [vmem:[%s1 + $0x198] sm:$0xff]
  %v67 = vld [vmem:[%s1 + $0x1a0] sm:$0xff]
  %v68 = vld [vmem:[%s1 + $0x1a8] sm:$0xff]
  %v69 = vld [vmem:[%s1 + $0x1b0] sm:$0xff]
  %v70 = vld [vmem:[%s1 + $0x1b8] sm:$0xff]
  %v71 = vld [vmem:[%s1 + $0x1c0] sm:$0xff]
  %v72 = vld [vmem:[%s1 + $0x1c8] sm:$0xff]
  %v73 = vld [vmem:[%s1 + $0x1d0] sm:$0xff]
  %v74 = vld [vmem:[%s1 + $0x1d8] sm:$0xff]
  %v75 = vld [vmem:[%s1 + $0x1e0] sm:$0xff]
  %v76 = vld [vmem:[%s1 + $0x1e8] sm:$0xff]
  %v77 = vld [vmem:[%s1 + $0x1f0] sm:$0xff]
  %v78 = vld [vmem:[%s1 + $0x1f8] sm:$0xff]
  %v79 = vmul.f32 %v15, %v15
  %v80 = vmul.f32 %v16, %v16
  %v81 = vmul.f32 %v17, %v17
  %v82 = vmul.f32 %v18, %v18
  %v83 = vmul.f32 %v19, %v19
  %v84 = vmul.f32 %v20, %v20
  %v85 = vmul.f32 %v21, %v21
  %v86 = vmul.f32 %v22, %v22
  %v87 = vmul.f32 %v23, %v23
  %v88 = vmul.f32 %v24, %v24
  %v89 = vmul.f32 %v25, %v25
  %v90 = vmul.f32 %v26, %v26
  %v91 = vmul.f32 %v27, %v27
  %v92 = vmul.f32 %v28, %v28
  %v93 = vmul.f32 %v29, %v29
  %v94 = vmul.f32 %v30, %v30
  %v95 = vmul.f32 %v31, %v31
  %v96 = vmul.f32 %v32, %v32
  %v97 = vmul.f32 %v33, %v33
  %v98 = vmul.f32 %v34, %v34
  %v99 = vmul.f32 %v35, %v35
  %v100 = vmul.f32 %v36, %v36
  %v101 = vmul.f32 %v37, %v37
  %v102 = vmul.f32 %v38, %v38
  %v103 = vmul.f32 %v39, %v39
  %v104 = vmul.f32 %v40, %v40
  %v105 = vmul.f32 %v41, %v41
  %v106 = vmul.f32 %v42, %v42
  %v107 = vmul.f32 %v43, %v43
  %v108 = vmul.f32 %v44, %v44
  %v109 = vmul.f32 %v45, %v45
  %v110 = vmul.f32 %v46, %v46
  %v111 = vmul.f32 %v47, %v47
  %v112 = vmul.f32 %v48, %v48
  %v113 = vmul.f32 %v49, %v49
  %v114 = vmul.f32 %v50, %v50
  %v115 = vmul.f32 %v51, %v51
  %v116 = vmul.f32 %v52, %v52
  %v117 = vmul.f32 %v53, %v53
  %v118 = vmul.f32 %v54, %v54
  %v119 = vmul.f32 %v55, %v55
  %v120 = vmul.f32 %v56, %v56
  %v121 = vmul.f32 %v57, %v57
  %v122 = vmul.f32 %v58, %v58
  %v123 = vmul.f32 %v59, %v59
  %v124 = vmul.f32 %v60, %v60
  %v125 = vmul.f32 %v61, %v61
  %v126 = vmul.f32 %v62, %v62
  %v127 = vmul.f32 %v63, %v63
  %v128 = vmul.f32 %v64, %v64
  %v129 = vmul.f32 %v65, %v65
  %v130 = vmul.f32 %v66, %v66
  %v131 = vmul.f32 %v67, %v67
  %v132 = vmul.f32 %v68, %v68
  %v133 = vmul.f32 %v69, %v69
  %v134 = vmul.f32 %v70, %v70
  %v135 = vmul.f32 %v71, %v71
  %v136 = vmul.f32 %v72, %v72
  %v137 = vmul.f32 %v73, %v73
  %v138 = vmul.f32 %v74, %v74
  %v139 = vmul.f32 %v75, %v75
  %v140 = vmul.f32 %v76, %v76
  %v141 = vmul.f32 %v77, %v77
  %v142 = vmul.f32 %v78, %v78
  %143 = vadd.xlane.f32.xlu0 %v79
  %v144 = vpop.xlane.xlu0 %143
  %145 = vadd.xlane.f32.xlu0 %v80
  %v146 = vpop.xlane.xlu0 %145
  %147 = vadd.xlane.f32.xlu0 %v81
  %v148 = vpop.xlane.xlu0 %147
  %149 = vadd.xlane.f32.xlu0 %v82
  %v150 = vpop.xlane.xlu0 %149
  %151 = vadd.xlane.f32.xlu0 %v83
  %v152 = vpop.xlane.xlu0 %151
  %153 = vadd.xlane.f32.xlu0 %v84
  %v154 = vpop.xlane.xlu0 %153
  %155 = vadd.xlane.f32.xlu0 %v85
  %v156 = vpop.xlane.xlu0 %155
  %157 = vadd.xlane.f32.xlu0 %v86
  %v158 = vpop.xlane.xlu0 %157
  %159 = vadd.xlane.f32.xlu0 %v87
  %v160 = vpop.xlane.xlu0 %159
  %161 = vadd.xlane.f32.xlu0 %v88
  %v162 = vpop.xlane.xlu0 %161
  %163 = vadd.xlane.f32.xlu0 %v89
  %v164 = vpop.xlane.xlu0 %163
  %165 = vadd.xlane.f32.xlu0 %v90
  %v166 = vpop.xlane.xlu0 %165
  %167 = vadd.xlane.f32.xlu0 %v91
  %v168 = vpop.xlane.xlu0 %167
  %169 = vadd.xlane.f32.xlu0 %v92
  %v170 = vpop.xlane.xlu0 %169
  %171 = vadd.xlane.f32.xlu0 %v93
  %v172 = vpop.xlane.xlu0 %171
  %173 = vadd.xlane.f32.xlu0 %v94
  %v174 = vpop.xlane.xlu0 %173
  %175 = vadd.xlane.f32.xlu0 %v95
  %v176 = vpop.xlane.xlu0 %175
  %177 = vadd.xlane.f32.xlu0 %v96
  %v178 = vpop.xlane.xlu0 %177
  %179 = vadd.xlane.f32.xlu0 %v97
  %v180 = vpop.xlane.xlu0 %179
  %181 = vadd.xlane.f32.xlu0 %v98
  %v182 = vpop.xlane.xlu0 %181
  %183 = vadd.xlane.f32.xlu0 %v99
  %v184 = vpop.xlane.xlu0 %183
  %185 = vadd.xlane.f32.xlu0 %v100
  %v186 = vpop.xlane.xlu0 %185
  %187 = vadd.xlane.f32.xlu0 %v101
  %v188 = vpop.xlane.xlu0 %187
  %189 = vadd.xlane.f32.xlu0 %v102
  %v190 = vpop.xlane.xlu0 %189
  %191 = vadd.xlane.f32.xlu0 %v103
  %v192 = vpop.xlane.xlu0 %191
  %193 = vadd.xlane.f32.xlu0 %v104
  %v194 = vpop.xlane.xlu0 %193
  %195 = vadd.xlane.f32.xlu0 %v105
  %v196 = vpop.xlane.xlu0 %195
  %197 = vadd.xlane.f32.xlu0 %v106
  %v198 = vpop.xlane.xlu0 %197
  %199 = vadd.xlane.f32.xlu0 %v107
  %v200 = vpop.xlane.xlu0 %199
  %201 = vadd.xlane.f32.xlu0 %v108
  %v202 = vpop.xlane.xlu0 %201
  %203 = vadd.xlane.f32.xlu0 %v109
  %v204 = vpop.xlane.xlu0 %203
  %205 = vadd.xlane.f32.xlu0 %v110
  %v206 = vpop.xlane.xlu0 %205
  %207 = vadd.xlane.f32.xlu0 %v111
  %v208 = vpop.xlane.xlu0 %207
  %209 = vadd.xlane.f32.xlu0 %v112
  %v210 = vpop.xlane.xlu0 %209
  %211 = vadd.xlane.f32.xlu0 %v113
  %v212 = vpop.xlane.xlu0 %211
  %213 = vadd.xlane.f32.xlu0 %v114
  %v214 = vpop.xlane.xlu0 %213
  %215 = vadd.xlane.f32.xlu0 %v115
  %v216 = vpop.xlane.xlu0 %215
  %217 = vadd.xlane.f32.xlu0 %v116
  %v218 = vpop.xlane.xlu0 %217
  %219 = vadd.xlane.f32.xlu0 %v117
  %v220 = vpop.xlane.xlu0 %219
  %221 = vadd.xlane.f32.xlu0 %v118
  %v222 = vpop.xlane.xlu0 %221
  %223 = vadd.xlane.f32.xlu0 %v119
  %v224 = vpop.xlane.xlu0 %223
  %225 = vadd.xlane.f32.xlu0 %v120
  %v226 = vpop.xlane.xlu0 %225
  %227 = vadd.xlane.f32.xlu0 %v121
  %v228 = vpop.xlane.xlu0 %227
  %229 = vadd.xlane.f32.xlu0 %v122
  %v230 = vpop.xlane.xlu0 %229
  %231 = vadd.xlane.f32.xlu0 %v123
  %v232 = vpop.xlane.xlu0 %231
  %233 = vadd.xlane.f32.xlu0 %v124
  %v234 = vpop.xlane.xlu0 %233
  %235 = vadd.xlane.f32.xlu0 %v125
  %v236 = vpop.xlane.xlu0 %235
  %237 = vadd.xlane.f32.xlu0 %v126
  %v238 = vpop.xlane.xlu0 %237
  %239 = vadd.xlane.f32.xlu0 %v127
  %v240 = vpop.xlane.xlu0 %239
  %241 = vadd.xlane.f32.xlu0 %v128
  %v242 = vpop.xlane.xlu0 %241
  %243 = vadd.xlane.f32.xlu0 %v129
  %v244 = vpop.xlane.xlu0 %243
  %245 = vadd.xlane.f32.xlu0 %v130
  %v246 = vpop.xlane.xlu0 %245
  %247 = vadd.xlane.f32.xlu0 %v131
  %v248 = vpop.xlane.xlu0 %247
  %249 = vadd.xlane.f32.xlu0 %v132
  %v250 = vpop.xlane.xlu0 %249
  %251 = vadd.xlane.f32.xlu0 %v133
  %v252 = vpop.xlane.xlu0 %251
  %253 = vadd.xlane.f32.xlu0 %v134
  %v254 = vpop.xlane.xlu0 %253
  %255 = vadd.xlane.f32.xlu0 %v135
  %v256 = vpop.xlane.xlu0 %255
  %257 = vadd.xlane.f32.xlu0 %v136
  %v258 = vpop.xlane.xlu0 %257
  %259 = vadd.xlane.f32.xlu0 %v137
  %v260 = vpop.xlane.xlu0 %259
  %261 = vadd.xlane.f32.xlu0 %v138
  %v262 = vpop.xlane.xlu0 %261
  %263 = vadd.xlane.f32.xlu0 %v139
  %v264 = vpop.xlane.xlu0 %263
  %265 = vadd.xlane.f32.xlu0 %v140
  %v266 = vpop.xlane.xlu0 %265
  %267 = vadd.xlane.f32.xlu0 %v141
  %v268 = vpop.xlane.xlu0 %267
  %269 = vadd.xlane.f32.xlu0 %v142
  %v270 = vpop.xlane.xlu0 %269
  %v271 = vrsqrt.pop %v144
  %v272 = vrsqrt.pop %v146
  %v273 = vrsqrt.pop %v148
  %v274 = vrsqrt.pop %v150
  %v275 = vrsqrt.pop %v152
  %v276 = vrsqrt.pop %v154
  %v277 = vrsqrt.pop %v156
  %v278 = vrsqrt.pop %v158
  %v279 = vrsqrt.pop %v160
  %v280 = vrsqrt.pop %v162
  %v281 = vrsqrt.pop %v164
  %v282 = vrsqrt.pop %v166
  %v283 = vrsqrt.pop %v168
  %v284 = vrsqrt.pop %v170
  %v285 = vrsqrt.pop %v172
  %v286 = vrsqrt.pop %v174
  %v287 = vrsqrt.pop %v176
  %v288 = vrsqrt.pop %v178
  %v289 = vrsqrt.pop %v180
  %v290 = vrsqrt.pop %v182
  %v291 = vrsqrt.pop %v184
  %v292 = vrsqrt.pop %v186
  %v293 = vrsqrt.pop %v188
  %v294 = vrsqrt.pop %v190
  %v295 = vrsqrt.pop %v192
  %v296 = vrsqrt.pop %v194
  %v297 = vrsqrt.pop %v196
  %v298 = vrsqrt.pop %v198
  %v299 = vrsqrt.pop %v200
  %v300 = vrsqrt.pop %v202
  %v301 = vrsqrt.pop %v204
  %v302 = vrsqrt.pop %v206
  %v303 = vrsqrt.pop %v208
  %v304 = vrsqrt.pop %v210
  %v305 = vrsqrt.pop %v212
  %v306 = vrsqrt.pop %v214
  %v307 = vrsqrt.pop %v216
  %v308 = vrsqrt.pop %v218
  %v309 = vrsqrt.pop %v220
  %v310 = vrsqrt.pop %v222
  %v311 = vrsqrt.pop %v224
  %v312 = vrsqrt.pop %v226
  %v313 = vrsqrt.pop %v228
  %v314 = vrsqrt.pop %v230
  %v315 = vrsqrt.pop %v232
  %v316 = vrsqrt.pop %v234
  %v317 = vrsqrt.pop %v236
  %v318 = vrsqrt.pop %v238
  %v319 = vrsqrt.pop %v240
  %v320 = vrsqrt.pop %v242
  %v321 = vrsqrt.pop %v244
  %v322 = vrsqrt.pop %v246
  %v323 = vrsqrt.pop %v248
  %v324 = vrsqrt.pop %v250
  %v325 = vrsqrt.pop %v252
  %v326 = vrsqrt.pop %v254
  %v327 = vrsqrt.pop %v256
  %v328 = vrsqrt.pop %v258
  %v329 = vrsqrt.pop %v260
  %v330 = vrsqrt.pop %v262
  %v331 = vrsqrt.pop %v264
  %v332 = vrsqrt.pop %v266
  %v333 = vrsqrt.pop %v268
  %v334 = vrsqrt.pop %v270
  %v335 = vmul.f32 %v15, %v271
  %v336 = vmul.f32 %v16, %v272
  %v337 = vmul.f32 %v17, %v273
  %v338 = vmul.f32 %v18, %v274
  %v339 = vmul.f32 %v19, %v275
  %v340 = vmul.f32 %v20, %v276
  %v341 = vmul.f32 %v21, %v277
  %v342 = vmul.f32 %v22, %v278
  %v343 = vmul.f32 %v23, %v279
  %v344 = vmul.f32 %v24, %v280
  %v345 = vmul.f32 %v25, %v281
  %v346 = vmul.f32 %v26, %v282
  %v347 = vmul.f32 %v27, %v283
  %v348 = vmul.f32 %v28, %v284
  %v349 = vmul.f32 %v29, %v285
  %v350 = vmul.f32 %v30, %v286
  %v351 = vmul.f32 %v31, %v287
  %v352 = vmul.f32 %v32, %v288
  %v353 = vmul.f32 %v33, %v289
  %v354 = vmul.f32 %v34, %v290
  %v355 = vmul.f32 %v35, %v291
  %v356 = vmul.f32 %v36, %v292
  %v357 = vmul.f32 %v37, %v293
  %v358 = vmul.f32 %v38, %v294
  %v359 = vmul.f32 %v39, %v295
  %v360 = vmul.f32 %v40, %v296
  %v361 = vmul.f32 %v41, %v297
  %v362 = vmul.f32 %v42, %v298
  %v363 = vmul.f32 %v43, %v299
  %v364 = vmul.f32 %v44, %v300
  %v365 = vmul.f32 %v45, %v301
  %v366 = vmul.f32 %v46, %v302
  %v367 = vmul.f32 %v47, %v303
  %v368 = vmul.f32 %v48, %v304
  %v369 = vmul.f32 %v49, %v305
  %v370 = vmul.f32 %v50, %v306
  %v371 = vmul.f32 %v51, %v307
  %v372 = vmul.f32 %v52, %v308
  %v373 = vmul.f32 %v53, %v309
  %v374 = vmul.f32 %v54, %v310
  %v375 = vmul.f32 %v55, %v311
  %v376 = vmul.f32 %v56, %v312
  %v377 = vmul.f32 %v57, %v313
  %v378 = vmul.f32 %v58, %v314
  %v379 = vmul.f32 %v59, %v315
  %v380 = vmul.f32 %v60, %v316
  %v381 = vmul.f32 %v61, %v317
  %v382 = vmul.f32 %v62, %v318
  %v383 = vmul.f32 %v63, %v319
  %v384 = vmul.f32 %v64, %v320
  %v385 = vmul.f32 %v65, %v321
  %v386 = vmul.f32 %v66, %v322
  %v387 = vmul.f32 %v67, %v323
  %v388 = vmul.f32 %v68, %v324
  %v389 = vmul.f32 %v69, %v325
  %v390 = vmul.f32 %v70, %v326
  %v391 = vmul.f32 %v71, %v327
  %v392 = vmul.f32 %v72, %v328
  %v393 = vmul.f32 %v73, %v329
  %v394 = vmul.f32 %v74, %v330
  %v395 = vmul.f32 %v75, %v331
  %v396 = vmul.f32 %v76, %v332
  %v397 = vmul.f32 %v77, %v333
  %v398 = vmul.f32 %v78, %v334
  %v399 = vld [vmem:[%s0] sm:$0xff]
  %v400 = vld [vmem:[%s0 + $0x8] sm:$0xff]
  %v401 = vld [vmem:[%s0 + $0x10] sm:$0xff]
  %v402 = vld [vmem:[%s0 + $0x18] sm:$0xff]
  %v403 = vpack.c.bf16 %v399, %v399
  %v404 = vpack.c.bf16 %v400, %v400
  %v405 = vpack.c.bf16 %v401, %v401
  %v406 = vpack.c.bf16 %v402, %v402
  %v407 = vpack.c.bf16 %v336, %v335
  %v408 = vpack.c.bf16 %v338, %v337
  %v409 = vpack.c.bf16 %v340, %v339
  %v410 = vpack.c.bf16 %v342, %v341
  %v411 = vpack.c.bf16 %v344, %v343
  %v412 = vpack.c.bf16 %v346, %v345
  %v413 = vpack.c.bf16 %v348, %v347
  %v414 = vpack.c.bf16 %v350, %v349
  %v415 = vpack.c.bf16 %v352, %v351
  %v416 = vpack.c.bf16 %v354, %v353
  %v417 = vpack.c.bf16 %v356, %v355
  %v418 = vpack.c.bf16 %v358, %v357
  %v419 = vpack.c.bf16 %v360, %v359
  %v420 = vpack.c.bf16 %v362, %v361
  %v421 = vpack.c.bf16 %v364, %v363
  %v422 = vpack.c.bf16 %v366, %v365
  %v423 = vpack.c.bf16 %v368, %v367
  %v424 = vpack.c.bf16 %v370, %v369
  %v425 = vpack.c.bf16 %v372, %v371
  %v426 = vpack.c.bf16 %v374, %v373
  %v427 = vpack.c.bf16 %v376, %v375
  %v428 = vpack.c.bf16 %v378, %v377
  %v429 = vpack.c.bf16 %v380, %v379
  %v430 = vpack.c.bf16 %v382, %v381
  %v431 = vpack.c.bf16 %v384, %v383
  %v432 = vpack.c.bf16 %v386, %v385
  %v433 = vpack.c.bf16 %v388, %v387
  %v434 = vpack.c.bf16 %v390, %v389
  %v435 = vpack.c.bf16 %v392, %v391
  %v436 = vpack.c.bf16 %v394, %v393
  %v437 = vpack.c.bf16 %v396, %v395
  %v438 = vpack.c.bf16 %v398, %v397
  %v439 = vld [vmem:[%s2] sm:$0x1]
  %v441 = vlaneseq
  %v442 = vshrl.u32 %v441, 7
  %v443 = vsub.s32 0, %v442
  %v444 = vrot.slane %v439, %v443
  %446 = vmatprep.subr.bf16.mxu0 0
  %447 = vmatpush1.bf16.msra.mxu0 %v407
  %448 = vmatprep.subr.bf16.mxu0 0
  %449 = vmatpush1.bf16.msra.mxu0 %v408
  %450 = vmatprep.subr.bf16.mxu0 0
  %451 = vmatpush1.bf16.msra.mxu0 %v409
  %452 = vmatprep.subr.bf16.mxu0 0
  %453 = vmatpush1.bf16.msra.mxu0 %v410
  %454 = vmatprep.subr.bf16.mxu0 0
  %455 = vmatpush1.bf16.msra.mxu0 %v411
  %456 = vmatprep.subr.bf16.mxu0 0
  %457 = vmatpush1.bf16.msra.mxu0 %v412
  %458 = vmatprep.subr.bf16.mxu0 0
  %459 = vmatpush1.bf16.msra.mxu0 %v413
  %460 = vmatprep.subr.bf16.mxu0 0
  %461 = vmatpush1.bf16.msra.mxu0 %v414
  %462 = vmatprep.subr.bf16.mxu0 0
  %463 = vmatpush1.bf16.msra.mxu0 %v415
  %464 = vmatprep.subr.bf16.mxu0 0
  %465 = vmatpush1.bf16.msra.mxu0 %v416
  %466 = vmatprep.subr.bf16.mxu0 0
  %467 = vmatpush1.bf16.msra.mxu0 %v417
  %468 = vmatprep.subr.bf16.mxu0 0
  %469 = vmatpush1.bf16.msra.mxu0 %v418
  %470 = vmatprep.subr.bf16.mxu0 0
  %471 = vmatpush1.bf16.msra.mxu0 %v419
  %472 = vmatprep.subr.bf16.mxu0 0
  %473 = vmatpush1.bf16.msra.mxu0 %v420
  %474 = vmatprep.subr.bf16.mxu0 0
  %475 = vmatpush1.bf16.msra.mxu0 %v421
  %476 = vmatprep.subr.bf16.mxu0 0
  %477 = vmatpush1.bf16.msra.mxu0 %v422
  %478 = vmatprep.mubr.bf16.mxu0 %v404
  %479 = vmatmul.mubr.bf16.gmra.mrb[0].mxu0 %v403
  %v480 = vpop.f32.mrb[0].mxu0
  %v481 = vadd.f32 %v444, %v480
  %v482 = vpop.f32.mrb[0].mxu0
  %v483 = vpop.f32.mrb[0].mxu0
  %v484 = vpop.f32.mrb[0].mxu0
  %485 = vdwg.mxu0
  %486 = vmatprep.subr.bf16.mxu0 0
  %487 = vmatpush1.bf16.msra.mxu0 %v423
  %488 = vmatprep.subr.bf16.mxu0 0
  %489 = vmatpush1.bf16.msra.mxu0 %v424
  %490 = vmatprep.subr.bf16.mxu0 0
  %491 = vmatpush1.bf16.msra.mxu0 %v425
  %492 = vmatprep.subr.bf16.mxu0 0
  %493 = vmatpush1.bf16.msra.mxu0 %v426
  %494 = vmatprep.subr.bf16.mxu0 0
  %495 = vmatpush1.bf16.msra.mxu0 %v427
  %496 = vmatprep.subr.bf16.mxu0 0
  %497 = vmatpush1.bf16.msra.mxu0 %v428
  %498 = vmatprep.subr.bf16.mxu0 0
  %499 = vmatpush1.bf16.msra.mxu0 %v429
  %500 = vmatprep.subr.bf16.mxu0 0
  %501 = vmatpush1.bf16.msra.mxu0 %v430
  %502 = vmatprep.subr.bf16.mxu0 0
  %503 = vmatpush1.bf16.msra.mxu0 %v431
  %504 = vmatprep.subr.bf16.mxu0 0
  %505 = vmatpush1.bf16.msra.mxu0 %v432
  %506 = vmatprep.subr.bf16.mxu0 0
  %507 = vmatpush1.bf16.msra.mxu0 %v433
  %508 = vmatprep.subr.bf16.mxu0 0
  %509 = vmatpush1.bf16.msra.mxu0 %v434
  %510 = vmatprep.subr.bf16.mxu0 0
  %511 = vmatpush1.bf16.msra.mxu0 %v435
  %512 = vmatprep.subr.bf16.mxu0 0
  %513 = vmatpush1.bf16.msra.mxu0 %v436
  %514 = vmatprep.subr.bf16.mxu0 0
  %515 = vmatpush1.bf16.msra.mxu0 %v437
  %516 = vmatprep.subr.bf16.mxu0 0
  %517 = vmatpush1.bf16.msra.mxu0 %v438
  %518 = vmatprep.mubr.bf16.mxu0 %v406
  %519 = vmatmul.mubr.bf16.gmra.mrb[0].mxu0 %v405
  %v520 = vpop.f32.mrb[0].mxu0
  %v521 = vadd.f32 %v481, %v520
  %v522 = vpop.f32.mrb[0].mxu0
  %v523 = vpop.f32.mrb[0].mxu0
  %v524 = vpop.f32.mrb[0].mxu0
  %525 = vdwg.mxu0
  %526 = vst [vmem:[%s3] sm:$0xff] %v521
  // Predicated region
  $region14: #{classifier_forward.1} parent=0 // pred_check
    _
  $region15: #{classifier_forward.1} parent=0 // pred_check_branch
    %528 = sbr.rel (0) target = $region17
  $region16: #{classifier_forward.1} parent=0 // pred_region
    _
  $region17: #{classifier_forward.1} parent=0 // pred_fallthru
    _
  // Predicated region
  $region18: #{classifier_forward.1} parent=0 // pred_check
    _
  $region19: #{classifier_forward.1} parent=0 // pred_check_branch
    %530 = sbr.rel (0) target = $region21
  $region20: #{classifier_forward.1} parent=0 // pred_region
    _
  $region21: #{classifier_forward.1} parent=0 // pred_fallthru
    _

</llo_original>
